<compile_context>
chip_gen: v6e
topology: v6e:2x2x1
jax: 0.10.0
libtpu: 0.0.40
codegen_flags: <defaults>
</compile_context>

<pallas_src>
import math

import jax
import jax.numpy as jnp
from jax.experimental import pallas as pl
from jax.experimental.pallas import tpu as pltpu


def _round_up(x: int, m: int) -> int:
    return ((x + m - 1) // m) * m


# -----------------------------------------------------------------------------
# Kernels
# -----------------------------------------------------------------------------

def _wide_kernel(t_ref, freqs_ref, out_ref):
    """One timestep per output row (dim is already lane-friendly).

    t_ref:     (TN, 1)    f32
    freqs_ref: (1, half)  f32   (constant block every grid step)
    out_ref:   (TN, dim)  out dtype
    """
    args = t_ref[...] * freqs_ref[...]                  # (TN, 1)*(1, half) -> (TN, half)
    half = args.shape[-1]
    cos = jnp.cos(args).astype(out_ref.dtype)
    sin = jnp.sin(args).astype(out_ref.dtype)
    if half % 128 == 0:
        # Both halves are lane-aligned: two unmasked dense stores, no
        # concatenate temporary.
        out_ref[:, :half] = cos
        out_ref[:, half:] = sin
    else:
        # Fallback (ragged-N small-dim corner): single full-width store.
        out_ref[...] = jnp.concatenate([cos, sin], axis=-1)


def _packed_kernel(t_ref, w_ref, sel_ref, out_ref):
    """g timesteps packed per output row so stores/DMA are lane-dense.

    t_ref:   (TN, g)      f32   g timesteps per packed row
    w_ref:   (g, g*dim)   f32   row j = [freqs|freqs] pattern, zeroed outside
                                group j's columns
    sel_ref: (1, g*dim)   f32   1.0 on cos columns, 0.0 on sin columns
    out_ref: (TN, g*dim)  out dtype
    """
    t = t_ref[...]                                       # (TN, g)
    g = t.shape[-1]
    # Exact f32 lane-expansion as a sum of g rank-1 broadcasts.  Off-group
    # entries of w are exactly 0.0, so the accumulation adds exact zeros and
    # args is bit-identical to t * freq.  (Deliberately not an MXU matmul:
    # keeps the math exact independent of matmul precision, and the VPU has
    # >20 ops/element of headroom in this HBM-write-bound kernel.)
    args = t[:, 0:1] * w_ref[0:1, :]                     # (TN, width)
    for j in range(1, g):                                # static unroll, g is tiny
        args = args + t[:, j:j + 1] * w_ref[j:j + 1, :]
    out_ref[...] = jnp.where(sel_ref[...] > 0.5,
                             jnp.cos(args), jnp.sin(args)).astype(out_ref.dtype)


# -----------------------------------------------------------------------------
# Wrapper
# -----------------------------------------------------------------------------

def _choose_row_tile(rows: int, row_bytes: int, target_tile_bytes: int,
                     min_grid_steps: int, row_align: int) -> int:
    """Row tile: sized by output bytes, aligned, and >= min_grid_steps blocks."""
    if rows <= row_align:
        return rows                                      # single block = full extent
    tn = _round_up(max(row_align, target_tile_bytes // max(row_bytes, 1)), row_align)
    # Keep enough grid steps that the "parallel" row axis feeds both
    # TensorCores on v7x and the DMA pipeline stays deep.
    tn = min(tn, _round_up(pl.cdiv(rows, min_grid_steps), row_align))
    # Never exceed the aligned row count (block must be aligned or full).
    return max(row_align, min(tn, (rows // row_align) * row_align))


def time_embedding(t: jax.Array, dim: int, max_period: float, *,
                   out_dtype=jnp.float32,
                   target_tile_bytes: int = 4 * 1024 * 1024,
                   min_grid_steps: int = 8) -> jax.Array:
    """Pallas TPU equivalent of TimeEmbedding(dim, max_period).forward(t)."""
    assert dim % 2 == 0
    half = dim // 2
    # Reference divides by (half - 1); half == 1 would be a div-by-zero there too.
    assert half > 1, "dim must be >= 4 ((half - 1) is a denominator)"

    t_flat = t.reshape(-1).astype(jnp.float32)           # matches torch .view(-1).float()
    n = t_flat.shape[0]
    assert n >= 1

    # Compile-time constant frequency table, hoisted out of the kernel.
    scale = jnp.float32(-math.log(max_period) / (half - 1))
    freqs = jnp.exp(scale * jnp.arange(half, dtype=jnp.float32))     # (half,)

    out_itemsize = jnp.dtype(out_dtype).itemsize
    row_align = 8 if out_itemsize >= 4 else (16 if out_itemsize == 2 else 32)

    # Lane packing: g timesteps per output row so width = g*dim is a multiple
    # of 128 (lane-dense stores & DMA).  Used when dim needs it and N divides
    # evenly; otherwise fall back to the plain layout rather than padding
    # (padding + out[:n] would re-read/re-write the whole output).
    g = 128 // math.gcd(dim, 128)
    use_split = (half % 128 == 0)                        # halves already lane aligned
    use_packed = (not use_split) and (n % g == 0)

    if use_packed:
        rows, width, lead = n // g, g * dim, g
    else:
        rows, width, lead = n, dim, 1

    tn = _choose_row_tile(rows, width * out_itemsize, target_tile_bytes,
                          min_grid_steps, row_align)
    grid = (pl.cdiv(rows, tn),)                          # ragged tail masked by Pallas

    t_spec = pl.BlockSpec((tn, lead), lambda i: (i, 0))
    out_spec = pl.BlockSpec((tn, width), lambda i: (i, 0))

    cost = pl.CostEstimate(
        flops=int(2 * rows * width * max(lead, 1)),
        transcendentals=int(2 * rows * width),
        bytes_accessed=int(rows * width * out_itemsize + n * 4 + (lead + 1) * width * 4),
    )
    compiler_params = pltpu.CompilerParams(
        dimension_semantics=("parallel",),               # shard rows across TCs on v7x
        vmem_limit_bytes=32 * 1024 * 1024,               # ~9 MiB used; headroom on all gens
    )

    if use_packed:
        t_in = t_flat.reshape(rows, g)                               # (rows, g)
        freq_pat = jnp.tile(jnp.concatenate([freqs, freqs]), g)      # (width,)
        col = jnp.arange(width)
        w = jnp.where((col // dim)[None, :] == jnp.arange(g)[:, None],
                      freq_pat[None, :], 0.0).astype(jnp.float32)    # (g, width)
        sel = ((col % dim) < half).astype(jnp.float32)[None, :]      # (1, width)
        out = pl.pallas_call(
            _packed_kernel,
            out_shape=jax.ShapeDtypeStruct((rows, width), out_dtype),
            grid=grid,
            in_specs=[t_spec,
                      pl.BlockSpec((g, width), lambda i: (0, 0)),
                      pl.BlockSpec((1, width), lambda i: (0, 0))],
            out_specs=out_spec,
            compiler_params=compiler_params,
            cost_estimate=cost,
        )(t_in, w, sel)
        return out.reshape(n, dim)                       # free row-major un-packing
    else:
        t_in = t_flat.reshape(rows, 1)                   # (N, 1)
        freqs2d = freqs.reshape(1, half)                 # (1, half)
        return pl.pallas_call(
            _wide_kernel,
            out_shape=jax.ShapeDtypeStruct((rows, dim), out_dtype),
            grid=grid,
            in_specs=[t_spec,
                      pl.BlockSpec((1, half), lambda i: (0, 0))],
            out_specs=out_spec,
            compiler_params=compiler_params,
            cost_estimate=cost,
        )(t_in, freqs2d)


# -----------------------------------------------------------------------------
# Reference + self-test
# -----------------------------------------------------------------------------

def _reference(t, dim, max_period):
    half = dim // 2
    i = jnp.arange(half, dtype=jnp.float32)
    freqs = jnp.exp(-math.log(max_period) / (half - 1) * i)
    args = t.reshape(-1, 1).astype(jnp.float32) * freqs.reshape(1, -1)
    return jnp.concatenate([jnp.cos(args), jnp.sin(args)], axis=-1)


if __name__ == "__main__":
    key = jax.random.PRNGKey(0)
    max_period = 10000.0

    cases = [
        (32, 32),    # packed lane-dense path: dim=32 -> 4 timesteps per 128-lane row
        (42, 256),   # wide path (half=128): two aligned stores, ragged grid tail
        (9, 32),     # fallback wide path (n % g != 0): concat store
    ]
    for n, dim in cases:
        key, sub = jax.random.split(key)
        t = jax.random.uniform(sub, (n,), dtype=jnp.float32) * 1000.0
        out = jax.block_until_ready(time_embedding(t, dim, max_period))
        ref = _reference(t, dim, max_period)
        assert out.shape == (n, dim), (out.shape, n, dim)
        assert out.dtype == jnp.float32
        assert jnp.allclose(out, ref, atol=1e-5, rtol=1e-5), f"mismatch n={n} dim={dim}"

    # bf16 output variant: math stays f32, only the store narrows (bandwidth win).
    key, sub = jax.random.split(key)
    t = jax.random.uniform(sub, (32,), dtype=jnp.float32) * 1000.0
    out_bf16 = jax.block_until_ready(
        time_embedding(t, 32, max_period, out_dtype=jnp.bfloat16))
    ref = _reference(t, 32, max_period)
    assert out_bf16.dtype == jnp.bfloat16
    assert jnp.allclose(out_bf16.astype(jnp.float32), ref, atol=1e-2, rtol=1e-2)

    print("KERNEL_OK")
</pallas_src>

<mosaic_0001>
module attributes {stable_mosaic.version = 11 : i64} {
  func.func @_packed_kernel(%arg0: i32, %arg1: memref<8x4xf32, #tpu.memory_space<vmem>>, %arg2: memref<4x128xf32, #tpu.memory_space<vmem>>, %arg3: memref<1x128xf32, #tpu.memory_space<vmem>>, %arg4: memref<8x128xf32, #tpu.memory_space<vmem>>) attributes {dimension_semantics = [#tpu.dimension_semantics<parallel>], iteration_bounds = array<i64: 1>, scalar_prefetch = 0 : i64, scratch_operands = 0 : i64, tpu.core_type = #tpu.core_type<tc>, window_params = [{transform_indices = @transform_0, window_bounds = array<i64: 8, 4>}, {pipeline_mode = #tpu.pipeline_mode<synchronous>, transform_indices = @transform_1, window_bounds = array<i64: 4, 128>}, {pipeline_mode = #tpu.pipeline_mode<synchronous>, transform_indices = @transform_2, window_bounds = array<i64: 1, 128>}, {transform_indices = @transform_3, window_bounds = array<i64: 8, 128>}]} {
    %c0 = arith.constant 0 : index
    %c0_0 = arith.constant 0 : index
    %0 = vector.load %arg1[%c0, %c0_0] : memref<8x4xf32, #tpu.memory_space<vmem>>, vector<8x4xf32>
    %1 = vector.extract_strided_slice %0 {offsets = [0, 0], sizes = [8, 1], strides = [1, 1]} : vector<8x4xf32> to vector<8x1xf32>
    %c0_1 = arith.constant 0 : index
    %c0_2 = arith.constant 0 : index
    %2 = vector.load %arg2[%c0_1, %c0_2] : memref<4x128xf32, #tpu.memory_space<vmem>>, vector<1x128xf32>
    %3 = vector.broadcast %1 : vector<8x1xf32> to vector<8x128xf32>
    %4 = vector.broadcast %2 : vector<1x128xf32> to vector<8x128xf32>
    %5 = arith.mulf %3, %4 : vector<8x128xf32>
    %6 = vector.extract_strided_slice %0 {offsets = [0, 1], sizes = [8, 1], strides = [1, 1]} : vector<8x4xf32> to vector<8x1xf32>
    %c1 = arith.constant 1 : index
    %c0_3 = arith.constant 0 : index
    %7 = vector.load %arg2[%c1, %c0_3] : memref<4x128xf32, #tpu.memory_space<vmem>>, vector<1x128xf32>
    %8 = vector.broadcast %6 : vector<8x1xf32> to vector<8x128xf32>
    %9 = vector.broadcast %7 : vector<1x128xf32> to vector<8x128xf32>
    %10 = arith.mulf %8, %9 : vector<8x128xf32>
    %11 = arith.addf %5, %10 : vector<8x128xf32>
    %12 = vector.extract_strided_slice %0 {offsets = [0, 2], sizes = [8, 1], strides = [1, 1]} : vector<8x4xf32> to vector<8x1xf32>
    %c2 = arith.constant 2 : index
    %c0_4 = arith.constant 0 : index
    %13 = vector.load %arg2[%c2, %c0_4] : memref<4x128xf32, #tpu.memory_space<vmem>>, vector<1x128xf32>
    %14 = vector.broadcast %12 : vector<8x1xf32> to vector<8x128xf32>
    %15 = vector.broadcast %13 : vector<1x128xf32> to vector<8x128xf32>
    %16 = arith.mulf %14, %15 : vector<8x128xf32>
    %17 = arith.addf %11, %16 : vector<8x128xf32>
    %18 = vector.extract_strided_slice %0 {offsets = [0, 3], sizes = [8, 1], strides = [1, 1]} : vector<8x4xf32> to vector<8x1xf32>
    %c3 = arith.constant 3 : index
    %c0_5 = arith.constant 0 : index
    %19 = vector.load %arg2[%c3, %c0_5] : memref<4x128xf32, #tpu.memory_space<vmem>>, vector<1x128xf32>
    %20 = vector.broadcast %18 : vector<8x1xf32> to vector<8x128xf32>
    %21 = vector.broadcast %19 : vector<1x128xf32> to vector<8x128xf32>
    %22 = arith.mulf %20, %21 : vector<8x128xf32>
    %23 = arith.addf %17, %22 : vector<8x128xf32>
    %c0_6 = arith.constant 0 : index
    %c0_7 = arith.constant 0 : index
    %24 = vector.load %arg3[%c0_6, %c0_7] : memref<1x128xf32, #tpu.memory_space<vmem>>, vector<1x128xf32>
    %cst = arith.constant 5.000000e-01 : f32
    %25 = vector.broadcast %cst : f32 to vector<1x128xf32>
    %26 = arith.cmpf ogt, %24, %25 : vector<1x128xf32>
    %27 = math.cos %23 : vector<8x128xf32>
    %28 = math.sin %23 : vector<8x128xf32>
    %29 = vector.shape_cast %26 : vector<1x128xi1> to vector<1x128xi1>
    %30 = vector.broadcast %29 : vector<1x128xi1> to vector<8x128xi1>
    %31 = arith.select %30, %27, %28 : vector<8x128xi1>, vector<8x128xf32>
    %c0_8 = arith.constant 0 : index
    %c0_9 = arith.constant 0 : index
    %32 = vector.load %arg4[%c0_8, %c0_9] : memref<8x128xf32, #tpu.memory_space<vmem>>, vector<8x128xf32>
    tpu.vector_store %arg4[%c0_8, %c0_9], %31 {strides = array<i32>} : memref<8x128xf32, #tpu.memory_space<vmem>>, vector<8x128xf32>,
    return
  }
  func.func @transform_0(%arg0: i32) -> (i32, i32) {
    %c0_i32 = arith.constant 0 : i32
    %c0_i32_0 = arith.constant 0 : i32
    return %arg0, %c0_i32 : i32, i32
  }
  func.func @transform_1(%arg0: i32) -> (i32, i32) {
    %c0_i32 = arith.constant 0 : i32
    %c0_i32_0 = arith.constant 0 : i32
    %c0_i32_1 = arith.constant 0 : i32
    return %c0_i32, %c0_i32_0 : i32, i32
  }
  func.func @transform_2(%arg0: i32) -> (i32, i32) {
    %c0_i32 = arith.constant 0 : i32
    %c0_i32_0 = arith.constant 0 : i32
    %c0_i32_1 = arith.constant 0 : i32
    return %c0_i32, %c0_i32_0 : i32, i32
  }
  func.func @transform_3(%arg0: i32) -> (i32, i32) {
    %c0_i32 = arith.constant 0 : i32
    %c0_i32_0 = arith.constant 0 : i32
    return %arg0, %c0_i32 : i32, i32
  }
}

</mosaic_0001>

<llo_original>
// kernel: tpu_custom_call.1
$region0: #{tpu_custom_call.1}
  #allocation0 [shape = 'u32[]', space=smem, size = 0x4, offset = 0x4, fixed_abs, tag = 'smem constant byte address 0x4 - core index']
  #allocation1 [shape = 'u32[144,128]{1,0:T(1,128)}', space=vmem, size = 0x12000, scoped, tag = 'internal scratch']
  %s0 = inlined_call_operand.vmem [shape: f32[8,4], index: 0, kind: input, shape index: {}]
  %s1 = inlined_call_operand.vmem [shape: f32[4,128], index: 1, kind: input, shape index: {}]
  %s2 = inlined_call_operand.vmem [shape: f32[1,128], index: 2, kind: input, shape index: {}]
  %s3 = inlined_call_operand.hbm [shape: f32[8,128], index: 3, kind: output, shape index: {}]
  %s4 = sld [smem:[#allocation0]]
  $region22: #{tpu_custom_call.1} parent=0
    _
  %s6 = ssub.s32 1, %s4
  %s7 = scalar_select 0, %s6, %s4
  $region1: #{tpu_custom_call.1} parent=0
    #allocation2 [shape = 'u8[4096]{0}', space=vmem, size = 0x1000, scoped, tag = 'output window, operand 0, single buffered']
    #allocation3 [shape = 's32[1]{0}', space=sflag, size = 0x4, scoped, tag = 'scoped memory for tpu_custom_call.1']
    %8 = vsyncpa [#allocation3], 0
    // Predicated region
    $region2: #{tpu_custom_call.1} parent=1 // pred_check
      _
    $region3: #{tpu_custom_call.1} parent=1 // pred_check_branch
      %10 = sbr.rel (0) target = $region5
    $region4: #{tpu_custom_call.1} parent=1 // pred_region
      _
    $region5: #{tpu_custom_call.1} parent=1 // pred_fallthru
      _
    // Predicated region
    $region6: #{tpu_custom_call.1} parent=1 // pred_check
      _
    $region7: #{tpu_custom_call.1} parent=1 // pred_check_branch
      %12 = sbr.rel (0) target = $region9
    $region8: #{tpu_custom_call.1} parent=1 // pred_region
      _
    $region9: #{tpu_custom_call.1} parent=1 // pred_fallthru
      _
    // Predicated region
    $region10: #{tpu_custom_call.1} parent=1 // pred_check
      _
    $region11: #{tpu_custom_call.1} parent=1 // pred_check_branch
      %14 = sbr.rel (0) target = $region13
    $region12: #{tpu_custom_call.1} parent=1 // pred_region
      _
    $region13: #{tpu_custom_call.1} parent=1 // pred_fallthru
      _
    %v15 = vld [vmem:[%s0] sm:$0xff]
    %v16 = vld [vmem:[%s1] sm:$0x1]
    %18 = vset.pattern.permute.xlu0 0
    %19 = vperm.xlu0 %18, %v15
    %v20 = vpop.permute.xlu0 %19
    %v22 = vlaneseq
    %v23 = vshrl.u32 %v22, 7
    %v24 = vsub.s32 0, %v23
    %v25 = vrot.slane %v16, %v24
    %v26 = vmul.f32 %v20, %v25
    %v27 = vld [vmem:[%s1 + $0x1] sm:$0x1]
    %28 = vset.pattern.permute.xlu0 1
    %29 = vperm.xlu0 %28, %v15
    %v30 = vpop.permute.xlu0 %29
    %v32 = vlaneseq
    %v33 = vshrl.u32 %v32, 7
    %v34 = vsub.s32 0, %v33
    %v35 = vrot.slane %v27, %v34
    %v36 = vmul.f32 %v30, %v35
    %v37 = vadd.f32 %v26, %v36
    %v38 = vld [vmem:[%s1 + $0x2] sm:$0x1]
    %39 = vset.pattern.permute.xlu0 2
    %40 = vperm.xlu0 %39, %v15
    %v41 = vpop.permute.xlu0 %40
    %v43 = vlaneseq
    %v44 = vshrl.u32 %v43, 7
    %v45 = vsub.s32 0, %v44
    %v46 = vrot.slane %v38, %v45
    %v47 = vmul.f32 %v41, %v46
    %v48 = vadd.f32 %v37, %v47
    %v49 = vld [vmem:[%s1 + $0x3] sm:$0x1]
    %50 = vset.pattern.permute.xlu0 3
    %51 = vperm.xlu0 %50, %v15
    %v52 = vpop.permute.xlu0 %51
    %v54 = vlaneseq
    %v55 = vshrl.u32 %v54, 7
    %v56 = vsub.s32 0, %v55
    %v57 = vrot.slane %v49, %v56
    %v58 = vmul.f32 %v52, %v57
    %v59 = vadd.f32 %v48, %v58
    %v60 = vld [vmem:[%s2] sm:$0x1]
    %vm61 = vcmp.gt.f32.partialorder %v60, 0.5
    %v62 = vand.u32 2147483647, %v59
    %vm63 = vcmp.le.f32.partialorder %v62, 0.7853982
    %vm64 = vcmp.lt.s32.totalorder %v59, 0
    %v65 = vand.u32 %v59, 2139095040
    %v66 = vshrl.u32 %v65, 23
    %v67 = vsub.s32 %v66, 127
    %v68 = vand.u32 2147483647, %v59
    %v69 = vand.u32 %v68, 8388607
    %v70 = vor.u32 %v69, 8388608
    %v71 = vsub.s32 0, %v70
    %v72 = vadd.s32 %v67, 1
    %vm73 = vcmp.gt.s32.totalorder %v72, 0
    %v74 = vsel %vm73, %v72, 0
    %v75 = vshrl.u32 %v74, 5
    %v76 = vand.u32 %v74, 31
    %v77 = vsub.s32 32, %v76
    %v78 = vshrl.u32 683565275, %v77
    %v79 = vshll.u32 683565275, %v76
    %v80 = vshrl.u32 2475754826, %v77
    %v81 = vor.u32 %v79, %v80
    %v82 = vshll.u32 2475754826, %v76
    %v83 = vshrl.u32 2131351028, %v77
    %v84 = vor.u32 %v82, %v83
    %v85 = vshll.u32 2131351028, %v76
    %v86 = vshrl.u32 2102212464, %v77
    %v87 = vor.u32 %v85, %v86
    %v88 = vshll.u32 2102212464, %v76
    %v89 = vshrl.u32 920167782, %v77
    %v90 = vor.u32 %v88, %v89
    %v91 = vshll.u32 920167782, %v76
    %v92 = vshrl.u32 1326507024, %v77
    %v93 = vor.u32 %v91, %v92
    %vm94 = vcmp.lt.s32.totalorder %v75, 1
    %vm95 = vcmp.lt.s32.totalorder %v75, 2
    %vm96 = vcmp.lt.s32.totalorder %v75, 3
    %vm97 = vcmp.lt.s32.totalorder %v75, 4
    %v98 = vsel %vm94, %v78, %v81
    %v99 = vsel %vm97, %v87, 2102212464
    %v100 = vsel %vm96, %v84, %v99
    %v101 = vsel %vm95, %v98, %v100
    %v102 = vsel %vm94, %v81, %v84
    %v103 = vsel %vm97, %v90, 920167782
    %v104 = vsel %vm96, %v87, %v103
    %v105 = vsel %vm95, %v102, %v104
    %v106 = vsel %vm94, %v84, %v87
    %v107 = vsel %vm97, %v93, 1326507024
    %v108 = vsel %vm96, %v90, %v107
    %v109 = vsel %vm95, %v106, %v108
    %v110 = vshll.u32 %v70, 8
    %v111 = vmul.u32.u64.compose %v110, %v109
    %v112 = vextract.low.u32 %v111
    %v113 = vextract.high.u32 %v111
    %v114 = vmul.u32.u64.compose %v110, %v105
    %v115 = vextract.low.u32 %v114
    %v116 = vextract.high.u32 %v114
    %v117 = vmul.u32 %v110, %v101
    %v118 = vadd.s32 %v113, %v115
    %vm119 = vc.u32 %v113, %v115
    %v120 = vadd.s32 %v116, 1
    %v121 = vsel %vm119, %v120, %v116
    %v122 = vadd.s32 %v117, %v121
    %v123 = vadd.s32 %v122, 536870912
    %v124 = vshrl.u32 %v123, 30
    %v125 = vshll.u32 %v124, 30
    %v126 = vsub.s32 %v122, %v125
    %vm127 = vcmp.lt.s32.totalorder %v126, 0
    %v128 = vsub.s32 0, %v126
    %v129 = vsel %vm127, %v128, %v126
    %v130 = vclz %v129
    %v131 = vsub.s32 %v130, 2
    %vm132 = vcmp.gt.s32.totalorder 0, %v131
    %v133 = vsel %vm132, 0, %v131
    %v134 = vsub.s32 32, %v133
    %v135 = vshll.u32 %v126, %v133
    %v136 = vshrl.u32 %v118, %v134
    %v137 = vor.u32 %v135, %v136
    %v138 = vsub.s32 4294967266, %v133
    %v139 = vadd.s32 %v138, 127
    %v140 = vshll.u32 %v139, 23
    %v141 = vor.u32 4788187, %v140
    %v142 = vand.u32 2147483647, %v141
    %v144 = vcvt.s32.f32 %v137
    %v145 = vmul.f32 %v144, %v142
    %v146 = vxor.u32 %v145, 2147483648
    %v147 = vsel %vm64, %v146, %v145
    %v148 = vsub.s32 4, %v124
    %v149 = vsel %vm64, %v148, %v124
    %v150 = vsel %vm63, %v59, %v147
    %v151 = vsel %vm63, 0, %v149
    %v152 = vcosq.f32.pop %v150
    %v153 = vsinq.f32.pop %v150
    %vm154 = vweird.f32 %v59
    %v155 = vand.u32 %v151, 3
    %vm156 = vcmp.lt.s32.totalorder %v155, 2
    %vm157 = vcmp.eq.s32.totalorder %v155, 0
    %v158 = vxor.u32 %v153, 2147483648
    %v159 = vsel %vm157, %v152, %v158
    %vm160 = vcmp.eq.s32.totalorder %v155, 2
    %v161 = vxor.u32 %v152, 2147483648
    %v162 = vsel %vm160, %v161, %v153
    %v163 = vsel %vm156, %v159, %v162
    %v164 = vsel %vm154, nan, %v163
    %v165 = vand.u32 2147483647, %v59
    %vm166 = vcmp.le.f32.partialorder %v165, 0.7853982
    %vm167 = vcmp.lt.s32.totalorder %v59, 0
    %v168 = vand.u32 %v59, 2139095040
    %v169 = vshrl.u32 %v168, 23
    %v170 = vsub.s32 %v169, 127
    %v171 = vand.u32 2147483647, %v59
    %v172 = vand.u32 %v171, 8388607
    %v173 = vor.u32 %v172, 8388608
    %v174 = vsub.s32 0, %v173
    %v175 = vadd.s32 %v170, 1
    %vm176 = vcmp.gt.s32.totalorder %v175, 0
    %v177 = vsel %vm176, %v175, 0
    %v178 = vshrl.u32 %v177, 5
    %v179 = vand.u32 %v177, 31
    %v180 = vsub.s32 32, %v179
    %v181 = vshrl.u32 683565275, %v180
    %v182 = vshll.u32 683565275, %v179
    %v183 = vshrl.u32 2475754826, %v180
    %v184 = vor.u32 %v182, %v183
    %v185 = vshll.u32 2475754826, %v179
    %v186 = vshrl.u32 2131351028, %v180
    %v187 = vor.u32 %v185, %v186
    %v188 = vshll.u32 2131351028, %v179
    %v189 = vshrl.u32 2102212464, %v180
    %v190 = vor.u32 %v188, %v189
    %v191 = vshll.u32 2102212464, %v179
    %v192 = vshrl.u32 920167782, %v180
    %v193 = vor.u32 %v191, %v192
    %v194 = vshll.u32 920167782, %v179
    %v195 = vshrl.u32 1326507024, %v180
    %v196 = vor.u32 %v194, %v195
    %vm197 = vcmp.lt.s32.totalorder %v178, 1
    %vm198 = vcmp.lt.s32.totalorder %v178, 2
    %vm199 = vcmp.lt.s32.totalorder %v178, 3
    %vm200 = vcmp.lt.s32.totalorder %v178, 4
    %v201 = vsel %vm197, %v181, %v184
    %v202 = vsel %vm200, %v190, 2102212464
    %v203 = vsel %vm199, %v187, %v202
    %v204 = vsel %vm198, %v201, %v203
    %v205 = vsel %vm197, %v184, %v187
    %v206 = vsel %vm200, %v193, 920167782
    %v207 = vsel %vm199, %v190, %v206
    %v208 = vsel %vm198, %v205, %v207
    %v209 = vsel %vm197, %v187, %v190
    %v210 = vsel %vm200, %v196, 1326507024
    %v211 = vsel %vm199, %v193, %v210
    %v212 = vsel %vm198, %v209, %v211
    %v213 = vshll.u32 %v173, 8
    %v214 = vmul.u32.u64.compose %v213, %v212
    %v215 = vextract.low.u32 %v214
    %v216 = vextract.high.u32 %v214
    %v217 = vmul.u32.u64.compose %v213, %v208
    %v218 = vextract.low.u32 %v217
    %v219 = vextract.high.u32 %v217
    %v220 = vmul.u32 %v213, %v204
    %v221 = vadd.s32 %v216, %v218
    %vm222 = vc.u32 %v216, %v218
    %v223 = vadd.s32 %v219, 1
    %v224 = vsel %vm222, %v223, %v219
    %v225 = vadd.s32 %v220, %v224
    %v226 = vadd.s32 %v225, 536870912
    %v227 = vshrl.u32 %v226, 30
    %v228 = vshll.u32 %v227, 30
    %v229 = vsub.s32 %v225, %v228
    %vm230 = vcmp.lt.s32.totalorder %v229, 0
    %v231 = vsub.s32 0, %v229
    %v232 = vsel %vm230, %v231, %v229
    %v233 = vclz %v232
    %v234 = vsub.s32 %v233, 2
    %vm235 = vcmp.gt.s32.totalorder 0, %v234
    %v236 = vsel %vm235, 0, %v234
    %v237 = vsub.s32 32, %v236
    %v238 = vshll.u32 %v229, %v236
    %v239 = vshrl.u32 %v221, %v237
    %v240 = vor.u32 %v238, %v239
    %v241 = vsub.s32 4294967266, %v236
    %v242 = vadd.s32 %v241, 127
    %v243 = vshll.u32 %v242, 23
    %v244 = vor.u32 4788187, %v243
    %v245 = vand.u32 2147483647, %v244
    %v247 = vcvt.s32.f32 %v240
    %v248 = vmul.f32 %v247, %v245
    %v249 = vxor.u32 %v248, 2147483648
    %v250 = vsel %vm167, %v249, %v248
    %v251 = vsub.s32 4, %v227
    %v252 = vsel %vm167, %v251, %v227
    %v253 = vsel %vm166, %v59, %v250
    %v254 = vsel %vm166, 0, %v252
    %v255 = vcosq.f32.pop %v253
    %v256 = vsinq.f32.pop %v253
    %vm257 = vweird.f32 %v59
    %v258 = vadd.s32 %v254, 3
    %v259 = vand.u32 %v258, 3
    %vm260 = vcmp.lt.s32.totalorder %v259, 2
    %vm261 = vcmp.eq.s32.totalorder %v259, 0
    %v262 = vxor.u32 %v256, 2147483648
    %v263 = vsel %vm261, %v255, %v262
    %vm264 = vcmp.eq.s32.totalorder %v259, 2
    %v265 = vxor.u32 %v255, 2147483648
    %v266 = vsel %vm264, %v265, %v256
    %v267 = vsel %vm260, %v263, %v266
    %v268 = vsel %vm257, nan, %v267
    %v269 = vsel %vm61, 1, 0
    %v270 = vlaneseq
    %v271 = vshrl.u32 %v270, 7
    %v272 = vsub.s32 0, %v271
    %v273 = vrot.slane %v269, %v272
    %vm274 = vcmp.eq.s32.totalorder %v273, 1
    %v275 = vsel %vm274, %v164, %v268
    %276 = vst [vmem:[#allocation2] sm:$0xff] %v275
    // Predicated region
    $region14: #{tpu_custom_call.1} parent=1 // pred_check
      _
    $region15: #{tpu_custom_call.1} parent=1 // pred_check_branch
      %278 = sbr.rel (0) target = $region17
    $region16: #{tpu_custom_call.1} parent=1 // pred_region
      %s280 = ssub.s32 128, 128
      %281 = vsyncadd [#allocation3], %s280
      %s283 = sshll.u32 [#allocation2], 4
      %s284 = int_to_ptr.vmem [resolvable:$true] %s283
      %286 = dma.vmem_to_hbm [thread:$0]  %s284, 128, %s3, [#allocation3]
    $region17: #{tpu_custom_call.1} parent=1 // pred_fallthru
      _
    // Predicated region
    $region18: #{tpu_custom_call.1} parent=1 // pred_check
      _
    $region19: #{tpu_custom_call.1} parent=1 // pred_check_branch
      %288 = sbr.rel (0) target = $region21
    $region20: #{tpu_custom_call.1} parent=1 // pred_region
      %289 = dma.done [#allocation3], 128
    $region21: #{tpu_custom_call.1} parent=1 // pred_fallthru
      _
    %290 = vsyncpa [#allocation3], 1

</llo_original>
